<compile_context>
chip_gen: v5e
topology: v5e:2x2
jax: 0.10.0
libtpu: 0.0.40
codegen_flags: <defaults>
</compile_context>

<pallas_src>
import math
import functools

import jax
import jax.numpy as jnp
from jax import lax
from jax.experimental import pallas as pl
from jax.experimental.pallas import tpu as pltpu


def _round_up(v, m):
    return (v + m - 1) // m * m


def _pick_t_blk(seq_len, cap=32):
    """Largest divisor of seq_len <= cap (no in-kernel tail masking needed);
    fall back to cap + masking only when the best divisor is tiny."""
    if seq_len <= cap:
        return seq_len
    best = 1
    for d in range(2, cap + 1):
        if seq_len % d == 0:
            best = d
    return best if best >= 8 else cap


def _rnn_recurrent_kernel(z_ref, whh_ref, out_ref, hn_ref, h_scratch,
                          *, t_blk, seq_len, seq_pad):
    """One (batch_block, time_block) grid step of the recurrence.

    z_ref    : (T_BLK, B_BLK, H_pad)  precomputed x@W_ih^T + (b_ih+b_hh) [+h0 term]
    whh_ref  : (H_pad, H_pad)         W_hh^T, VMEM-resident (constant index map)
    out_ref  : (T_BLK, B_BLK, H_pad)  hidden states for this time block
    hn_ref   : (B_BLK, H_pad)         final hidden state (written once)
    h_scratch: VMEM carry of the hidden state across time blocks.
    """
    tb = pl.program_id(1)  # time-block index (inner, sequential axis)

    # Reset the carried hidden state at the start of each batch block.
    @pl.when(tb == 0)
    def _():
        h_scratch[...] = jnp.zeros_like(h_scratch)

    whh = whh_ref[...]

    def step(i, h):
        z = z_ref[i] + jnp.dot(h, whh, preferred_element_type=jnp.float32)
        h_new = jnp.tanh(z)  # single EUP push; same math as the module's tanh
        if seq_pad != seq_len:
            # Padded (out-of-range) timesteps must not advance the hidden state,
            # otherwise h_n would be polluted.  Compiled out when no padding.
            global_t = tb * t_blk + i
            h_new = jnp.where(global_t < seq_len, h_new, h)
        out_ref[i] = h_new.astype(out_ref.dtype)
        return h_new

    h_final = lax.fori_loop(0, t_blk, step, h_scratch[...], unroll=True)
    h_scratch[...] = h_final

    # Write h_n only once, on the last time block (resident accumulator).
    @pl.when(tb == pl.num_programs(1) - 1)
    def _():
        hn_ref[...] = h_final.astype(hn_ref.dtype)


def rnn_forward(x, w_ih, b_ih, w_hh, b_hh, h0=None, batch_first=False):
    """Elman RNN forward pass (tanh nonlinearity). Returns (output, h_n)."""
    if batch_first:
        x = jnp.transpose(x, (1, 0, 2))
    seq_len, batch, _input_size = x.shape
    hidden_size = w_hh.shape[0]
    f32 = jnp.float32
    hi = jax.lax.Precision.HIGHEST

    # ---- Hoisted input projection: one big parallel matmul + fused biases ----
    bias = jnp.asarray(b_ih, f32) + jnp.asarray(b_hh, f32)
    z = jnp.einsum('tbi,hi->tbh', x.astype(f32), jnp.asarray(w_ih, f32),
                   precision=hi) + bias
    if h0 is not None:
        # h_1 = tanh(x_0 W_ih^T + b + h_0 W_hh^T): fold the h_0 term into z[0]
        # so the in-kernel carry always starts at zero.
        z = z.at[0].add(jnp.dot(h0.astype(f32), jnp.asarray(w_hh, f32).T,
                                precision=hi))

    # ---- Pad to TPU-friendly tiles: lanes (H) -> 128, sublanes (B) -> 8 ----
    H_pad = _round_up(hidden_size, 128)
    B_pad = _round_up(batch, 8)
    B_BLK = B_pad if B_pad <= 128 else 128
    B_pad = _round_up(B_pad, B_BLK)
    T_BLK = _pick_t_blk(seq_len)
    seq_pad = _round_up(seq_len, T_BLK)

    z = jnp.pad(z, ((0, seq_pad - seq_len),
                    (0, B_pad - batch),
                    (0, H_pad - hidden_size)))
    whh_t = jnp.pad(jnp.asarray(w_hh, f32).T,
                    ((0, H_pad - hidden_size), (0, H_pad - hidden_size)))

    grid = (B_pad // B_BLK, seq_pad // T_BLK)

    # VMEM budget with headroom, capped so it is legal on every generation.
    vmem_needed = 4 * (2 * 2 * T_BLK * B_BLK * H_pad   # z + out, double buffered
                       + 2 * H_pad * H_pad             # resident W_hh^T
                       + 2 * B_BLK * H_pad)            # h_n + scratch
    vmem_limit = int(min(max(2 * vmem_needed, 32 * 1024 * 1024),
                         64 * 1024 * 1024))

    kernel = functools.partial(_rnn_recurrent_kernel,
                               t_blk=T_BLK, seq_len=seq_len, seq_pad=seq_pad)

    out, h_n = pl.pallas_call(
        kernel,
        out_shape=(
            jax.ShapeDtypeStruct((seq_pad, B_pad, H_pad), f32),
            jax.ShapeDtypeStruct((B_pad, H_pad), f32),
        ),
        grid_spec=pltpu.PrefetchScalarGridSpec(
            num_scalar_prefetch=0,
            grid=grid,
            in_specs=[
                pl.BlockSpec((T_BLK, B_BLK, H_pad), lambda b, t: (t, b, 0)),
                pl.BlockSpec((H_pad, H_pad), lambda b, t: (0, 0)),
            ],
            out_specs=[
                pl.BlockSpec((T_BLK, B_BLK, H_pad), lambda b, t: (t, b, 0)),
                pl.BlockSpec((B_BLK, H_pad), lambda b, t: (b, 0)),
            ],
            scratch_shapes=[pltpu.VMEM((B_BLK, H_pad), f32)],
        ),
        compiler_params=pltpu.CompilerParams(
            # batch axis is dependency-free (megacore on v7x); time is sequential.
            dimension_semantics=("parallel", "arbitrary"),
            vmem_limit_bytes=vmem_limit,
        ),
    )(z, whh_t)

    out = out[:seq_len, :batch, :hidden_size].astype(x.dtype)
    h_n = h_n[:batch, :hidden_size].astype(x.dtype)
    if batch_first:
        out = jnp.transpose(out, (1, 0, 2))
    return out, h_n


def _reference_rnn(x, w_ih, b_ih, w_hh, b_hh, h0=None):
    seq_len, batch, _ = x.shape
    h = (jnp.zeros((batch, w_ih.shape[0]), dtype=x.dtype)
         if h0 is None else h0.astype(x.dtype))
    hi = jax.lax.Precision.HIGHEST
    outs = []
    for t in range(seq_len):
        h = jnp.tanh(jnp.dot(x[t], w_ih.T, precision=hi) + b_ih
                     + jnp.dot(h, w_hh.T, precision=hi) + b_hh)
        outs.append(h)
    return jnp.stack(outs, axis=0), h


if __name__ == "__main__":
    # Small deterministic setup (module shapes: w_ih (H,I), w_hh (H,H), b_* (H,))
    seq_len, batch, input_size, hidden_size = 8, 4, 16, 32
    std = 1.0 / math.sqrt(hidden_size)

    key = jax.random.PRNGKey(0)
    k_x, k_wih, k_bih, k_whh, k_bhh, k_h0 = jax.random.split(key, 6)
    x = jax.random.normal(k_x, (seq_len, batch, input_size), dtype=jnp.float32)
    w_ih = jax.random.uniform(k_wih, (hidden_size, input_size),
                              minval=-std, maxval=std, dtype=jnp.float32)
    b_ih = jax.random.uniform(k_bih, (hidden_size,),
                              minval=-std, maxval=std, dtype=jnp.float32)
    w_hh = jax.random.uniform(k_whh, (hidden_size, hidden_size),
                              minval=-std, maxval=std, dtype=jnp.float32)
    b_hh = jax.random.uniform(k_bhh, (hidden_size,),
                              minval=-std, maxval=std, dtype=jnp.float32)

    # Case 1: time-major, zero initial state (module defaults).
    fwd = jax.jit(functools.partial(rnn_forward, batch_first=False))
    out, h_n = fwd(x, w_ih, b_ih, w_hh, b_hh)
    jax.block_until_ready((out, h_n))

    ref_out, ref_hn = _reference_rnn(x, w_ih, b_ih, w_hh, b_hh)
    assert out.shape == (seq_len, batch, hidden_size)
    assert h_n.shape == (batch, hidden_size)
    assert jnp.allclose(out, ref_out, atol=1e-5, rtol=1e-5)
    assert jnp.allclose(h_n, ref_hn, atol=1e-5, rtol=1e-5)

    # Case 2: batch_first, explicit h_0, seq length not matching the tile
    # (exercises the padded-timestep mask path and the h_0 fold-in).
    seq2 = 5
    x2 = jax.random.normal(k_x, (batch, seq2, input_size), dtype=jnp.float32)
    h0 = jax.random.normal(k_h0, (batch, hidden_size), dtype=jnp.float32)
    fwd_bf = jax.jit(functools.partial(rnn_forward, batch_first=True))
    out2, hn2 = fwd_bf(x2, w_ih, b_ih, w_hh, b_hh, h0)
    jax.block_until_ready((out2, hn2))

    ref_out2, ref_hn2 = _reference_rnn(jnp.transpose(x2, (1, 0, 2)),
                                       w_ih, b_ih, w_hh, b_hh, h0)
    assert out2.shape == (batch, seq2, hidden_size)
    assert jnp.allclose(out2, jnp.transpose(ref_out2, (1, 0, 2)),
                        atol=1e-5, rtol=1e-5)
    assert jnp.allclose(hn2, ref_hn2, atol=1e-5, rtol=1e-5)

    # TODO(synk): backward() / save_cache bookkeeping of the module is training
    # machinery and is not implemented here (forward pass only).
    print("KERNEL_OK")
</pallas_src>

<mosaic_0001>
module attributes {stable_mosaic.version = 11 : i64} {
  func.func @_rnn_recurrent_kernel(%arg0: i32, %arg1: i32, %arg2: memref<8x8x128xf32, #tpu.memory_space<vmem>>, %arg3: memref<128x128xf32, #tpu.memory_space<vmem>>, %arg4: memref<8x8x128xf32, #tpu.memory_space<vmem>>, %arg5: memref<8x128xf32, #tpu.memory_space<vmem>>, %arg6: memref<8x128xf32, #tpu.memory_space<vmem>>) attributes {dimension_semantics = [#tpu.dimension_semantics<parallel>, #tpu.dimension_semantics<arbitrary>], iteration_bounds = array<i64: 1, 1>, scalar_prefetch = 0 : i64, scratch_operands = 1 : i64, tpu.core_type = #tpu.core_type<tc>, window_params = [{transform_indices = @transform_0, window_bounds = array<i64: 8, 8, 128>}, {pipeline_mode = #tpu.pipeline_mode<synchronous>, transform_indices = @transform_1, window_bounds = array<i64: 128, 128>}, {transform_indices = @transform_2, window_bounds = array<i64: 8, 8, 128>}, {transform_indices = @transform_3, window_bounds = array<i64: 8, 128>}]} {
    %c0_i32 = arith.constant 0 : i32
    %0 = arith.cmpi eq, %arg1, %c0_i32 : i32
    %1 = arith.extui %0 : i1 to i32
    %c0_i32_0 = arith.constant 0 : i32
    %2 = arith.cmpi ne, %1, %c0_i32_0 : i32
    scf.if %2 {
      %cst_48 = arith.constant 0.000000e+00 : f32
      %89 = vector.broadcast %cst_48 : f32 to vector<8x128xf32>
      %c0_49 = arith.constant 0 : index
      %c0_50 = arith.constant 0 : index
      %90 = vector.load %arg6[%c0_49, %c0_50] : memref<8x128xf32, #tpu.memory_space<vmem>>, vector<8x128xf32>
      tpu.vector_store %arg6[%c0_49, %c0_50], %89 {strides = array<i32>} : memref<8x128xf32, #tpu.memory_space<vmem>>, vector<8x128xf32>,
    } else {
    }
    %c0 = arith.constant 0 : index
    %c0_1 = arith.constant 0 : index
    %3 = vector.load %arg3[%c0, %c0_1] : memref<128x128xf32, #tpu.memory_space<vmem>>, vector<128x128xf32>
    %c0_2 = arith.constant 0 : index
    %c0_3 = arith.constant 0 : index
    %4 = vector.load %arg6[%c0_2, %c0_3] : memref<8x128xf32, #tpu.memory_space<vmem>>, vector<8x128xf32>
    %c0_i32_4 = arith.constant 0 : i32
    %5 = arith.index_cast %c0_i32_4 : i32 to index
    %c0_5 = arith.constant 0 : index
    %c0_6 = arith.constant 0 : index
    %6 = vector.load %arg2[%5, %c0_5, %c0_6] : memref<8x8x128xf32, #tpu.memory_space<vmem>>, vector<1x8x128xf32>
    %7 = vector.shape_cast %6 : vector<1x8x128xf32> to vector<8x128xf32>
    %cst = arith.constant dense<0.000000e+00> : vector<8x128xf32>
    %8 = tpu.matmul %4, %3, %cst {dimension_numbers = #tpu.dot_dimension_numbers<[1], [0], [0], [1], [0, 0, 1, 1], [], []>} : vector<8x128xf32>, vector<128x128xf32>, vector<8x128xf32> -> vector<8x128xf32>
    %9 = arith.addf %7, %8 : vector<8x128xf32>
    %10 = math.tanh %9 : vector<8x128xf32>
    %11 = arith.index_cast %c0_i32_4 : i32 to index
    %c0_7 = arith.constant 0 : index
    %c0_8 = arith.constant 0 : index
    %12 = vector.load %arg4[%11, %c0_7, %c0_8] : memref<8x8x128xf32, #tpu.memory_space<vmem>>, vector<1x8x128xf32>
    %13 = vector.shape_cast %12 : vector<1x8x128xf32> to vector<8x128xf32>
    %14 = vector.shape_cast %10 : vector<8x128xf32> to vector<1x8x128xf32>
    tpu.vector_store %arg4[%11, %c0_7, %c0_8], %14 {strides = array<i32>} : memref<8x8x128xf32, #tpu.memory_space<vmem>>, vector<1x8x128xf32>,
    %c1_i32 = arith.constant 1 : i32
    %15 = arith.index_cast %c1_i32 : i32 to index
    %c0_9 = arith.constant 0 : index
    %c0_10 = arith.constant 0 : index
    %16 = vector.load %arg2[%15, %c0_9, %c0_10] : memref<8x8x128xf32, #tpu.memory_space<vmem>>, vector<1x8x128xf32>
    %17 = vector.shape_cast %16 : vector<1x8x128xf32> to vector<8x128xf32>
    %cst_11 = arith.constant dense<0.000000e+00> : vector<8x128xf32>
    %18 = tpu.matmul %10, %3, %cst_11 {dimension_numbers = #tpu.dot_dimension_numbers<[1], [0], [0], [1], [0, 0, 1, 1], [], []>} : vector<8x128xf32>, vector<128x128xf32>, vector<8x128xf32> -> vector<8x128xf32>
    %19 = arith.addf %17, %18 : vector<8x128xf32>
    %20 = math.tanh %19 : vector<8x128xf32>
    %21 = arith.index_cast %c1_i32 : i32 to index
    %c0_12 = arith.constant 0 : index
    %c0_13 = arith.constant 0 : index
    %22 = vector.load %arg4[%21, %c0_12, %c0_13] : memref<8x8x128xf32, #tpu.memory_space<vmem>>, vector<1x8x128xf32>
    %23 = vector.shape_cast %22 : vector<1x8x128xf32> to vector<8x128xf32>
    %24 = vector.shape_cast %20 : vector<8x128xf32> to vector<1x8x128xf32>
    tpu.vector_store %arg4[%21, %c0_12, %c0_13], %24 {strides = array<i32>} : memref<8x8x128xf32, #tpu.memory_space<vmem>>, vector<1x8x128xf32>,
    %c2_i32 = arith.constant 2 : i32
    %25 = arith.index_cast %c2_i32 : i32 to index
    %c0_14 = arith.constant 0 : index
    %c0_15 = arith.constant 0 : index
    %26 = vector.load %arg2[%25, %c0_14, %c0_15] : memref<8x8x128xf32, #tpu.memory_space<vmem>>, vector<1x8x128xf32>
    %27 = vector.shape_cast %26 : vector<1x8x128xf32> to vector<8x128xf32>
    %cst_16 = arith.constant dense<0.000000e+00> : vector<8x128xf32>
    %28 = tpu.matmul %20, %3, %cst_16 {dimension_numbers = #tpu.dot_dimension_numbers<[1], [0], [0], [1], [0, 0, 1, 1], [], []>} : vector<8x128xf32>, vector<128x128xf32>, vector<8x128xf32> -> vector<8x128xf32>
    %29 = arith.addf %27, %28 : vector<8x128xf32>
    %30 = math.tanh %29 : vector<8x128xf32>
    %31 = arith.index_cast %c2_i32 : i32 to index
    %c0_17 = arith.constant 0 : index
    %c0_18 = arith.constant 0 : index
    %32 = vector.load %arg4[%31, %c0_17, %c0_18] : memref<8x8x128xf32, #tpu.memory_space<vmem>>, vector<1x8x128xf32>
    %33 = vector.shape_cast %32 : vector<1x8x128xf32> to vector<8x128xf32>
    %34 = vector.shape_cast %30 : vector<8x128xf32> to vector<1x8x128xf32>
    tpu.vector_store %arg4[%31, %c0_17, %c0_18], %34 {strides = array<i32>} : memref<8x8x128xf32, #tpu.memory_space<vmem>>, vector<1x8x128xf32>,
    %c3_i32 = arith.constant 3 : i32
    %35 = arith.index_cast %c3_i32 : i32 to index
    %c0_19 = arith.constant 0 : index
    %c0_20 = arith.constant 0 : index
    %36 = vector.load %arg2[%35, %c0_19, %c0_20] : memref<8x8x128xf32, #tpu.memory_space<vmem>>, vector<1x8x128xf32>
    %37 = vector.shape_cast %36 : vector<1x8x128xf32> to vector<8x128xf32>
    %cst_21 = arith.constant dense<0.000000e+00> : vector<8x128xf32>
    %38 = tpu.matmul %30, %3, %cst_21 {dimension_numbers = #tpu.dot_dimension_numbers<[1], [0], [0], [1], [0, 0, 1, 1], [], []>} : vector<8x128xf32>, vector<128x128xf32>, vector<8x128xf32> -> vector<8x128xf32>
    %39 = arith.addf %37, %38 : vector<8x128xf32>
    %40 = math.tanh %39 : vector<8x128xf32>
    %41 = arith.index_cast %c3_i32 : i32 to index
    %c0_22 = arith.constant 0 : index
    %c0_23 = arith.constant 0 : index
    %42 = vector.load %arg4[%41, %c0_22, %c0_23] : memref<8x8x128xf32, #tpu.memory_space<vmem>>, vector<1x8x128xf32>
    %43 = vector.shape_cast %42 : vector<1x8x128xf32> to vector<8x128xf32>
    %44 = vector.shape_cast %40 : vector<8x128xf32> to vector<1x8x128xf32>
    tpu.vector_store %arg4[%41, %c0_22, %c0_23], %44 {strides = array<i32>} : memref<8x8x128xf32, #tpu.memory_space<vmem>>, vector<1x8x128xf32>,
    %c4_i32 = arith.constant 4 : i32
    %45 = arith.index_cast %c4_i32 : i32 to index
    %c0_24 = arith.constant 0 : index
    %c0_25 = arith.constant 0 : index
    %46 = vector.load %arg2[%45, %c0_24, %c0_25] : memref<8x8x128xf32, #tpu.memory_space<vmem>>, vector<1x8x128xf32>
    %47 = vector.shape_cast %46 : vector<1x8x128xf32> to vector<8x128xf32>
    %cst_26 = arith.constant dense<0.000000e+00> : vector<8x128xf32>
    %48 = tpu.matmul %40, %3, %cst_26 {dimension_numbers = #tpu.dot_dimension_numbers<[1], [0], [0], [1], [0, 0, 1, 1], [], []>} : vector<8x128xf32>, vector<128x128xf32>, vector<8x128xf32> -> vector<8x128xf32>
    %49 = arith.addf %47, %48 : vector<8x128xf32>
    %50 = math.tanh %49 : vector<8x128xf32>
    %51 = arith.index_cast %c4_i32 : i32 to index
    %c0_27 = arith.constant 0 : index
    %c0_28 = arith.constant 0 : index
    %52 = vector.load %arg4[%51, %c0_27, %c0_28] : memref<8x8x128xf32, #tpu.memory_space<vmem>>, vector<1x8x128xf32>
    %53 = vector.shape_cast %52 : vector<1x8x128xf32> to vector<8x128xf32>
    %54 = vector.shape_cast %50 : vector<8x128xf32> to vector<1x8x128xf32>
    tpu.vector_store %arg4[%51, %c0_27, %c0_28], %54 {strides = array<i32>} : memref<8x8x128xf32, #tpu.memory_space<vmem>>, vector<1x8x128xf32>,
    %c5_i32 = arith.constant 5 : i32
    %55 = arith.index_cast %c5_i32 : i32 to index
    %c0_29 = arith.constant 0 : index
    %c0_30 = arith.constant 0 : index
    %56 = vector.load %arg2[%55, %c0_29, %c0_30] : memref<8x8x128xf32, #tpu.memory_space<vmem>>, vector<1x8x128xf32>
    %57 = vector.shape_cast %56 : vector<1x8x128xf32> to vector<8x128xf32>
    %cst_31 = arith.constant dense<0.000000e+00> : vector<8x128xf32>
    %58 = tpu.matmul %50, %3, %cst_31 {dimension_numbers = #tpu.dot_dimension_numbers<[1], [0], [0], [1], [0, 0, 1, 1], [], []>} : vector<8x128xf32>, vector<128x128xf32>, vector<8x128xf32> -> vector<8x128xf32>
    %59 = arith.addf %57, %58 : vector<8x128xf32>
    %60 = math.tanh %59 : vector<8x128xf32>
    %61 = arith.index_cast %c5_i32 : i32 to index
    %c0_32 = arith.constant 0 : index
    %c0_33 = arith.constant 0 : index
    %62 = vector.load %arg4[%61, %c0_32, %c0_33] : memref<8x8x128xf32, #tpu.memory_space<vmem>>, vector<1x8x128xf32>
    %63 = vector.shape_cast %62 : vector<1x8x128xf32> to vector<8x128xf32>
    %64 = vector.shape_cast %60 : vector<8x128xf32> to vector<1x8x128xf32>
    tpu.vector_store %arg4[%61, %c0_32, %c0_33], %64 {strides = array<i32>} : memref<8x8x128xf32, #tpu.memory_space<vmem>>, vector<1x8x128xf32>,
    %c6_i32 = arith.constant 6 : i32
    %65 = arith.index_cast %c6_i32 : i32 to index
    %c0_34 = arith.constant 0 : index
    %c0_35 = arith.constant 0 : index
    %66 = vector.load %arg2[%65, %c0_34, %c0_35] : memref<8x8x128xf32, #tpu.memory_space<vmem>>, vector<1x8x128xf32>
    %67 = vector.shape_cast %66 : vector<1x8x128xf32> to vector<8x128xf32>
    %cst_36 = arith.constant dense<0.000000e+00> : vector<8x128xf32>
    %68 = tpu.matmul %60, %3, %cst_36 {dimension_numbers = #tpu.dot_dimension_numbers<[1], [0], [0], [1], [0, 0, 1, 1], [], []>} : vector<8x128xf32>, vector<128x128xf32>, vector<8x128xf32> -> vector<8x128xf32>
    %69 = arith.addf %67, %68 : vector<8x128xf32>
    %70 = math.tanh %69 : vector<8x128xf32>
    %71 = arith.index_cast %c6_i32 : i32 to index
    %c0_37 = arith.constant 0 : index
    %c0_38 = arith.constant 0 : index
    %72 = vector.load %arg4[%71, %c0_37, %c0_38] : memref<8x8x128xf32, #tpu.memory_space<vmem>>, vector<1x8x128xf32>
    %73 = vector.shape_cast %72 : vector<1x8x128xf32> to vector<8x128xf32>
    %74 = vector.shape_cast %70 : vector<8x128xf32> to vector<1x8x128xf32>
    tpu.vector_store %arg4[%71, %c0_37, %c0_38], %74 {strides = array<i32>} : memref<8x8x128xf32, #tpu.memory_space<vmem>>, vector<1x8x128xf32>,
    %c7_i32 = arith.constant 7 : i32
    %75 = arith.index_cast %c7_i32 : i32 to index
    %c0_39 = arith.constant 0 : index
    %c0_40 = arith.constant 0 : index
    %76 = vector.load %arg2[%75, %c0_39, %c0_40] : memref<8x8x128xf32, #tpu.memory_space<vmem>>, vector<1x8x128xf32>
    %77 = vector.shape_cast %76 : vector<1x8x128xf32> to vector<8x128xf32>
    %cst_41 = arith.constant dense<0.000000e+00> : vector<8x128xf32>
    %78 = tpu.matmul %70, %3, %cst_41 {dimension_numbers = #tpu.dot_dimension_numbers<[1], [0], [0], [1], [0, 0, 1, 1], [], []>} : vector<8x128xf32>, vector<128x128xf32>, vector<8x128xf32> -> vector<8x128xf32>
    %79 = arith.addf %77, %78 : vector<8x128xf32>
    %80 = math.tanh %79 : vector<8x128xf32>
    %81 = arith.index_cast %c7_i32 : i32 to index
    %c0_42 = arith.constant 0 : index
    %c0_43 = arith.constant 0 : index
    %82 = vector.load %arg4[%81, %c0_42, %c0_43] : memref<8x8x128xf32, #tpu.memory_space<vmem>>, vector<1x8x128xf32>
    %83 = vector.shape_cast %82 : vector<1x8x128xf32> to vector<8x128xf32>
    %84 = vector.shape_cast %80 : vector<8x128xf32> to vector<1x8x128xf32>
    tpu.vector_store %arg4[%81, %c0_42, %c0_43], %84 {strides = array<i32>} : memref<8x8x128xf32, #tpu.memory_space<vmem>>, vector<1x8x128xf32>,
    %c8_i32 = arith.constant 8 : i32
    %c0_44 = arith.constant 0 : index
    %c0_45 = arith.constant 0 : index
    %85 = vector.load %arg6[%c0_44, %c0_45] : memref<8x128xf32, #tpu.memory_space<vmem>>, vector<8x128xf32>
    tpu.vector_store %arg6[%c0_44, %c0_45], %80 {strides = array<i32>} : memref<8x128xf32, #tpu.memory_space<vmem>>, vector<8x128xf32>,
    %c0_i32_46 = arith.constant 0 : i32
    %86 = arith.cmpi eq, %arg1, %c0_i32_46 : i32
    %87 = arith.extui %86 : i1 to i32
    %c0_i32_47 = arith.constant 0 : i32
    %88 = arith.cmpi ne, %87, %c0_i32_47 : i32
    scf.if %88 {
      %c0_48 = arith.constant 0 : index
      %c0_49 = arith.constant 0 : index
      %89 = vector.load %arg5[%c0_48, %c0_49] : memref<8x128xf32, #tpu.memory_space<vmem>>, vector<8x128xf32>
      tpu.vector_store %arg5[%c0_48, %c0_49], %80 {strides = array<i32>} : memref<8x128xf32, #tpu.memory_space<vmem>>, vector<8x128xf32>,
    } else {
    }
    return
  }
  func.func @transform_0(%arg0: i32, %arg1: i32) -> (i32, i32, i32) {
    %c0_i32 = arith.constant 0 : i32
    %c0_i32_0 = arith.constant 0 : i32
    return %arg1, %arg0, %c0_i32 : i32, i32, i32
  }
  func.func @transform_1(%arg0: i32, %arg1: i32) -> (i32, i32) {
    %c0_i32 = arith.constant 0 : i32
    %c0_i32_0 = arith.constant 0 : i32
    %c0_i32_1 = arith.constant 0 : i32
    return %c0_i32, %c0_i32_0 : i32, i32
  }
  func.func @transform_2(%arg0: i32, %arg1: i32) -> (i32, i32, i32) {
    %c0_i32 = arith.constant 0 : i32
    %c0_i32_0 = arith.constant 0 : i32
    return %arg1, %arg0, %c0_i32 : i32, i32, i32
  }
  func.func @transform_3(%arg0: i32, %arg1: i32) -> (i32, i32) {
    %c0_i32 = arith.constant 0 : i32
    %c0_i32_0 = arith.constant 0 : i32
    return %arg0, %c0_i32 : i32, i32
  }
}

</mosaic_0001>

<llo_original>
// kernel: rnn_forward.1
$region0: #{rnn_forward.1}
  #allocation0 [shape = 'u32[]', space=smem, size = 0x4, offset = 0x4, fixed_abs, tag = 'smem constant byte address 0x4 - core index']
  #allocation1 [shape = 'u32[72,128]{1,0:T(1,128)}', space=vmem, size = 0x9000, scoped, tag = 'internal scratch']
  #allocation2 [shape = 'f32[8,128]{1,0:T(8,128)}', space=vmem, size = 0x1000, scoped, tag = 'scratch operand']
  %s0 = inlined_call_operand.vmem [shape: f32[8,8,128], index: 0, kind: input, shape index: {}]
  %s1 = inlined_call_operand.vmem [shape: f32[128,128], index: 1, kind: input, shape index: {}]
  %s2 = inlined_call_operand.vmem [shape: f32[8,8,128], index: 2, kind: output, shape index: {0}]
  %s3 = inlined_call_operand.vmem [shape: f32[8,128], index: 3, kind: output, shape index: {1}]
  %4 = xla_tuple %s2, %s3
  %s5 = sld [smem:[#allocation0]]
  $region34: #{rnn_forward.1} parent=0
    _
  %s7 = ssub.s32 1, %s5
  %s8 = scalar_select 0, %s7, %s5
  // Predicated region
  $region2: #{rnn_forward.1} parent=0 // pred_check
    _
  $region3: #{rnn_forward.1} parent=0 // pred_check_branch
    %10 = sbr.rel (0) target = $region5
  $region4: #{rnn_forward.1} parent=0 // pred_region
    _
  $region5: #{rnn_forward.1} parent=0 // pred_fallthru
    _
  // Predicated region
  $region6: #{rnn_forward.1} parent=0 // pred_check
    _
  $region7: #{rnn_forward.1} parent=0 // pred_check_branch
    %12 = sbr.rel (0) target = $region9
  $region8: #{rnn_forward.1} parent=0 // pred_region
    _
  $region9: #{rnn_forward.1} parent=0 // pred_fallthru
    _
  %p13 = scmp.eq.s32.totalorder 0, 0
  // Predicated region
  $region10: #{rnn_forward.1} parent=0 // pred_check
    %p14 = pneg %p13
  $region11: #{rnn_forward.1} parent=0 // pred_check_branch
    %16 = sbr.rel (%p14) target = $region13
  $region12: #{rnn_forward.1} parent=0 // pred_region
    %17 = vst [vmem:[#allocation2] sm:$0xff] 0.0
  $region13: #{rnn_forward.1} parent=0 // pred_fallthru
    _
  %v18 = vld [vmem:[%s1] sm:$0xff]
  %v19 = vld [vmem:[%s1 + $0x8] sm:$0xff]
  %v20 = vld [vmem:[%s1 + $0x10] sm:$0xff]
  %v21 = vld [vmem:[%s1 + $0x18] sm:$0xff]
  %v22 = vld [vmem:[%s1 + $0x20] sm:$0xff]
  %v23 = vld [vmem:[%s1 + $0x28] sm:$0xff]
  %v24 = vld [vmem:[%s1 + $0x30] sm:$0xff]
  %v25 = vld [vmem:[%s1 + $0x38] sm:$0xff]
  %v26 = vld [vmem:[%s1 + $0x40] sm:$0xff]
  %v27 = vld [vmem:[%s1 + $0x48] sm:$0xff]
  %v28 = vld [vmem:[%s1 + $0x50] sm:$0xff]
  %v29 = vld [vmem:[%s1 + $0x58] sm:$0xff]
  %v30 = vld [vmem:[%s1 + $0x60] sm:$0xff]
  %v31 = vld [vmem:[%s1 + $0x68] sm:$0xff]
  %v32 = vld [vmem:[%s1 + $0x70] sm:$0xff]
  %v33 = vld [vmem:[%s1 + $0x78] sm:$0xff]
  %v34 = vld [vmem:[#allocation2] sm:$0xff]
  %v35 = vld [vmem:[%s0] sm:$0xff]
  %36 = vmatpush.msra.mxu0 %v33
  %37 = vmatpush.msra.mxu0 %v32
  %38 = vmatpush.msra.mxu0 %v31
  %39 = vmatpush.msra.mxu0 %v30
  %40 = vmatpush.msra.mxu0 %v29
  %41 = vmatpush.msra.mxu0 %v28
  %42 = vmatpush.msra.mxu0 %v27
  %43 = vmatpush.msra.mxu0 %v26
  %44 = vmatpush.msra.mxu0 %v25
  %45 = vmatpush.msra.mxu0 %v24
  %46 = vmatpush.msra.mxu0 %v23
  %47 = vmatpush.msra.mxu0 %v22
  %48 = vmatpush.msra.mxu0 %v21
  %49 = vmatpush.msra.mxu0 %v20
  %50 = vmatpush.msra.mxu0 %v19
  %51 = vmatpush.msra.mxu0 %v18
  %52 = vmatmul.f32.gmra.mxu0 %v34
  %v53 = vpop.f32.mrf.mxu0
  %v54 = vadd.f32 0.0, %v53
  %55 = vdwg.mxu0
  %v56 = vadd.f32 %v35, %v54
  %v57 = vtanh.pop %v56
  %58 = vst [vmem:[%s2] sm:$0xff] %v57
  %s59 = scalar_lea.vmem %s0, 8
  %v60 = vld [vmem:[%s59] sm:$0xff]
  %61 = vmatpush.msra.mxu0 %v33
  %62 = vmatpush.msra.mxu0 %v32
  %63 = vmatpush.msra.mxu0 %v31
  %64 = vmatpush.msra.mxu0 %v30
  %65 = vmatpush.msra.mxu0 %v29
  %66 = vmatpush.msra.mxu0 %v28
  %67 = vmatpush.msra.mxu0 %v27
  %68 = vmatpush.msra.mxu0 %v26
  %69 = vmatpush.msra.mxu0 %v25
  %70 = vmatpush.msra.mxu0 %v24
  %71 = vmatpush.msra.mxu0 %v23
  %72 = vmatpush.msra.mxu0 %v22
  %73 = vmatpush.msra.mxu0 %v21
  %74 = vmatpush.msra.mxu0 %v20
  %75 = vmatpush.msra.mxu0 %v19
  %76 = vmatpush.msra.mxu0 %v18
  %77 = vmatmul.f32.gmra.mxu0 %v57
  %v78 = vpop.f32.mrf.mxu0
  %v79 = vadd.f32 0.0, %v78
  %80 = vdwg.mxu0
  %v81 = vadd.f32 %v60, %v79
  %v82 = vtanh.pop %v81
  %s83 = scalar_lea.vmem %s2, 8
  %84 = vst [vmem:[%s83] sm:$0xff] %v82
  %s85 = scalar_lea.vmem %s0, 16
  %v86 = vld [vmem:[%s85] sm:$0xff]
  %87 = vmatpush.msra.mxu0 %v33
  %88 = vmatpush.msra.mxu0 %v32
  %89 = vmatpush.msra.mxu0 %v31
  %90 = vmatpush.msra.mxu0 %v30
  %91 = vmatpush.msra.mxu0 %v29
  %92 = vmatpush.msra.mxu0 %v28
  %93 = vmatpush.msra.mxu0 %v27
  %94 = vmatpush.msra.mxu0 %v26
  %95 = vmatpush.msra.mxu0 %v25
  %96 = vmatpush.msra.mxu0 %v24
  %97 = vmatpush.msra.mxu0 %v23
  %98 = vmatpush.msra.mxu0 %v22
  %99 = vmatpush.msra.mxu0 %v21
  %100 = vmatpush.msra.mxu0 %v20
  %101 = vmatpush.msra.mxu0 %v19
  %102 = vmatpush.msra.mxu0 %v18
  %103 = vmatmul.f32.gmra.mxu0 %v82
  %v104 = vpop.f32.mrf.mxu0
  %v105 = vadd.f32 0.0, %v104
  %106 = vdwg.mxu0
  %v107 = vadd.f32 %v86, %v105
  %v108 = vtanh.pop %v107
  %s109 = scalar_lea.vmem %s2, 16
  %110 = vst [vmem:[%s109] sm:$0xff] %v108
  %s111 = scalar_lea.vmem %s0, 24
  %v112 = vld [vmem:[%s111] sm:$0xff]
  %113 = vmatpush.msra.mxu0 %v33
  %114 = vmatpush.msra.mxu0 %v32
  %115 = vmatpush.msra.mxu0 %v31
  %116 = vmatpush.msra.mxu0 %v30
  %117 = vmatpush.msra.mxu0 %v29
  %118 = vmatpush.msra.mxu0 %v28
  %119 = vmatpush.msra.mxu0 %v27
  %120 = vmatpush.msra.mxu0 %v26
  %121 = vmatpush.msra.mxu0 %v25
  %122 = vmatpush.msra.mxu0 %v24
  %123 = vmatpush.msra.mxu0 %v23
  %124 = vmatpush.msra.mxu0 %v22
  %125 = vmatpush.msra.mxu0 %v21
  %126 = vmatpush.msra.mxu0 %v20
  %127 = vmatpush.msra.mxu0 %v19
  %128 = vmatpush.msra.mxu0 %v18
  %129 = vmatmul.f32.gmra.mxu0 %v108
  %v130 = vpop.f32.mrf.mxu0
  %v131 = vadd.f32 0.0, %v130
  %132 = vdwg.mxu0
  %v133 = vadd.f32 %v112, %v131
  %v134 = vtanh.pop %v133
  %s135 = scalar_lea.vmem %s2, 24
  %136 = vst [vmem:[%s135] sm:$0xff] %v134
  %s137 = scalar_lea.vmem %s0, 32
  %v138 = vld [vmem:[%s137] sm:$0xff]
  %139 = vmatpush.msra.mxu0 %v33
  %140 = vmatpush.msra.mxu0 %v32
  %141 = vmatpush.msra.mxu0 %v31
  %142 = vmatpush.msra.mxu0 %v30
  %143 = vmatpush.msra.mxu0 %v29
  %144 = vmatpush.msra.mxu0 %v28
  %145 = vmatpush.msra.mxu0 %v27
  %146 = vmatpush.msra.mxu0 %v26
  %147 = vmatpush.msra.mxu0 %v25
  %148 = vmatpush.msra.mxu0 %v24
  %149 = vmatpush.msra.mxu0 %v23
  %150 = vmatpush.msra.mxu0 %v22
  %151 = vmatpush.msra.mxu0 %v21
  %152 = vmatpush.msra.mxu0 %v20
  %153 = vmatpush.msra.mxu0 %v19
  %154 = vmatpush.msra.mxu0 %v18
  %155 = vmatmul.f32.gmra.mxu0 %v134
  %v156 = vpop.f32.mrf.mxu0
  %v157 = vadd.f32 0.0, %v156
  %158 = vdwg.mxu0
  %v159 = vadd.f32 %v138, %v157
  %v160 = vtanh.pop %v159
  %s161 = scalar_lea.vmem %s2, 32
  %162 = vst [vmem:[%s161] sm:$0xff] %v160
  %s163 = scalar_lea.vmem %s0, 40
  %v164 = vld [vmem:[%s163] sm:$0xff]
  %165 = vmatpush.msra.mxu0 %v33
  %166 = vmatpush.msra.mxu0 %v32
  %167 = vmatpush.msra.mxu0 %v31
  %168 = vmatpush.msra.mxu0 %v30
  %169 = vmatpush.msra.mxu0 %v29
  %170 = vmatpush.msra.mxu0 %v28
  %171 = vmatpush.msra.mxu0 %v27
  %172 = vmatpush.msra.mxu0 %v26
  %173 = vmatpush.msra.mxu0 %v25
  %174 = vmatpush.msra.mxu0 %v24
  %175 = vmatpush.msra.mxu0 %v23
  %176 = vmatpush.msra.mxu0 %v22
  %177 = vmatpush.msra.mxu0 %v21
  %178 = vmatpush.msra.mxu0 %v20
  %179 = vmatpush.msra.mxu0 %v19
  %180 = vmatpush.msra.mxu0 %v18
  %181 = vmatmul.f32.gmra.mxu0 %v160
  %v182 = vpop.f32.mrf.mxu0
  %v183 = vadd.f32 0.0, %v182
  %184 = vdwg.mxu0
  %v185 = vadd.f32 %v164, %v183
  %v186 = vtanh.pop %v185
  %s187 = scalar_lea.vmem %s2, 40
  %188 = vst [vmem:[%s187] sm:$0xff] %v186
  %s189 = scalar_lea.vmem %s0, 48
  %v190 = vld [vmem:[%s189] sm:$0xff]
  %191 = vmatpush.msra.mxu0 %v33
  %192 = vmatpush.msra.mxu0 %v32
  %193 = vmatpush.msra.mxu0 %v31
  %194 = vmatpush.msra.mxu0 %v30
  %195 = vmatpush.msra.mxu0 %v29
  %196 = vmatpush.msra.mxu0 %v28
  %197 = vmatpush.msra.mxu0 %v27
  %198 = vmatpush.msra.mxu0 %v26
  %199 = vmatpush.msra.mxu0 %v25
  %200 = vmatpush.msra.mxu0 %v24
  %201 = vmatpush.msra.mxu0 %v23
  %202 = vmatpush.msra.mxu0 %v22
  %203 = vmatpush.msra.mxu0 %v21
  %204 = vmatpush.msra.mxu0 %v20
  %205 = vmatpush.msra.mxu0 %v19
  %206 = vmatpush.msra.mxu0 %v18
  %207 = vmatmul.f32.gmra.mxu0 %v186
  %v208 = vpop.f32.mrf.mxu0
  %v209 = vadd.f32 0.0, %v208
  %210 = vdwg.mxu0
  %v211 = vadd.f32 %v190, %v209
  %v212 = vtanh.pop %v211
  %s213 = scalar_lea.vmem %s2, 48
  %214 = vst [vmem:[%s213] sm:$0xff] %v212
  %s215 = scalar_lea.vmem %s0, 56
  %v216 = vld [vmem:[%s215] sm:$0xff]
  %217 = vmatpush.msra.mxu0 %v33
  %218 = vmatpush.msra.mxu0 %v32
  %219 = vmatpush.msra.mxu0 %v31
  %220 = vmatpush.msra.mxu0 %v30
  %221 = vmatpush.msra.mxu0 %v29
  %222 = vmatpush.msra.mxu0 %v28
  %223 = vmatpush.msra.mxu0 %v27
  %224 = vmatpush.msra.mxu0 %v26
  %225 = vmatpush.msra.mxu0 %v25
  %226 = vmatpush.msra.mxu0 %v24
  %227 = vmatpush.msra.mxu0 %v23
  %228 = vmatpush.msra.mxu0 %v22
  %229 = vmatpush.msra.mxu0 %v21
  %230 = vmatpush.msra.mxu0 %v20
  %231 = vmatpush.msra.mxu0 %v19
  %232 = vmatpush.msra.mxu0 %v18
  %233 = vmatmul.f32.gmra.mxu0 %v212
  %v234 = vpop.f32.mrf.mxu0
  %v235 = vadd.f32 0.0, %v234
  %236 = vdwg.mxu0
  %v237 = vadd.f32 %v216, %v235
  %v238 = vtanh.pop %v237
  %s239 = scalar_lea.vmem %s2, 56
  %240 = vst [vmem:[%s239] sm:$0xff] %v238
  %241 = vst [vmem:[#allocation2] sm:$0xff] %v238
  // Predicated region
  $region14: #{rnn_forward.1} parent=0 // pred_check
    %p242 = pneg %p13
  $region15: #{rnn_forward.1} parent=0 // pred_check_branch
    %244 = sbr.rel (%p242) target = $region17
  $region16: #{rnn_forward.1} parent=0 // pred_region
    %245 = vst [vmem:[%s3] sm:$0xff] %v238
  $region17: #{rnn_forward.1} parent=0 // pred_fallthru
    _
  // Predicated region
  $region18: #{rnn_forward.1} parent=0 // pred_check
    _
  $region19: #{rnn_forward.1} parent=0 // pred_check_branch
    %247 = sbr.rel (0) target = $region21
  $region20: #{rnn_forward.1} parent=0 // pred_region
    _
  $region21: #{rnn_forward.1} parent=0 // pred_fallthru
    _
  // Predicated region
  $region22: #{rnn_forward.1} parent=0 // pred_check
    _
  $region23: #{rnn_forward.1} parent=0 // pred_check_branch
    %249 = sbr.rel (0) target = $region25
  $region24: #{rnn_forward.1} parent=0 // pred_region
    _
  $region25: #{rnn_forward.1} parent=0 // pred_fallthru
    _
  // Predicated region
  $region26: #{rnn_forward.1} parent=0 // pred_check
    _
  $region27: #{rnn_forward.1} parent=0 // pred_check_branch
    %251 = sbr.rel (0) target = $region29
  $region28: #{rnn_forward.1} parent=0 // pred_region
    _
  $region29: #{rnn_forward.1} parent=0 // pred_fallthru
    _
  // Predicated region
  $region30: #{rnn_forward.1} parent=0 // pred_check
    _
  $region31: #{rnn_forward.1} parent=0 // pred_check_branch
    %253 = sbr.rel (0) target = $region33
  $region32: #{rnn_forward.1} parent=0 // pred_region
    _
  $region33: #{rnn_forward.1} parent=0 // pred_fallthru
    _

</llo_original>
